<compile_context>
chip_gen: v7x
topology: tpu7x:2x2x1
jax: 0.10.0
libtpu: 0.0.40
codegen_flags: <defaults>
</compile_context>

<pallas_src>
import functools

import jax
import jax.numpy as jnp
from jax.experimental import pallas as pl
from jax.experimental.pallas import tpu as pltpu


def _convln_kernel(x_ref, wb_ref, o_ref, *, eps):
    # x_ref: (1, C, T_HW), wb_ref: (2, C, 1) f32 [weight; bias], o_ref: (1, C, T_HW)
    x = x_ref[...].astype(jnp.float32)

    # Two-pass moments over the channel (sublane) axis — matches torch reference exactly.
    mean = jnp.mean(x, axis=1, keepdims=True)        # (1, 1, T)
    xc = x - mean
    var = jnp.mean(xc * xc, axis=1, keepdims=True)   # (1, 1, T)

    # One rsqrt per spatial column (EUP slot), then cheap VPU multiplies.
    inv = jax.lax.rsqrt(var + eps)                   # (1, 1, T)

    wb = wb_ref[...]                                 # (2, C, 1), already f32
    w = wb[0:1]                                      # (1, C, 1)
    b = wb[1:2]                                      # (1, C, 1)

    o_ref[...] = (xc * inv * w + b).astype(o_ref.dtype)


def _vmem_capacity_bytes():
    """Physical VMEM of the current chip; conservative (v7x-sized) fallback."""
    try:
        return int(pltpu.get_tpu_info().vmem_capacity_bytes)
    except Exception:
        return 64 << 20


def _dimension_semantics():
    """Grid = (B, n_hw). On v7x, shard the HW-tile axis across the 2 TensorCores."""
    try:
        kind = jax.devices()[0].device_kind.lower()
    except Exception:
        kind = ""
    if "v7" in kind:
        return (pltpu.PARALLEL, pltpu.CORE_PARALLEL)
    return ("parallel", "parallel")


def _plan_hw_tiling(C, HW, itemsize, vmem_bytes, B):
    """Pick (t_hw, n_hw, hw_pad): lane-dense tile size (multiple of 128), number of HW
    tiles per batch row, and the padded HW extent (= n_hw * t_hw)."""
    LANE = 128
    if HW <= LANE:
        # Full-extent block is always legal; data is tiny so tiling is irrelevant.
        return HW, 1, HW

    hw_blocks = pl.cdiv(HW, LANE)  # 128-lane chunks needed to cover HW

    # Live VMEM per lane: double-buffered in/out tiles + ~3 f32 temporaries in the body
    # (x cast, xc, xc*xc) — correct even for bf16 inputs.
    live_per_lane = C * (4 * itemsize + 12)
    max_blocks_live = max(1, (vmem_bytes // 3) // (live_per_lane * LANE))
    # Bytes-based cap on a single raw tile (~8 MiB) replaces the old fixed 4096-lane cap.
    max_blocks_tile = max(1, (8 << 20) // (C * itemsize * LANE))
    max_t_blocks = max(1, min(max_blocks_live, max_blocks_tile, hw_blocks))

    # Number of HW tiles per batch row; keep >= ~4 total grid steps so the pipeline overlaps.
    n_hw = pl.cdiv(hw_blocks, max_t_blocks)
    n_hw = min(hw_blocks, max(n_hw, pl.cdiv(4, max(B, 1))))

    t_blocks = pl.cdiv(hw_blocks, n_hw)
    hw_pad = n_hw * t_blocks * LANE          # padding waste is < n_hw blocks of 128 lanes
    return t_blocks * LANE, n_hw, hw_pad


def conv_layer_norm(x, weight, bias, eps=1e-6):
    """x: (B, C, H, W) NCHW; weight, bias: (C,). Returns (B, C, H, W)."""
    B, C, H, W = x.shape
    HW = H * W

    vmem_bytes = _vmem_capacity_bytes()
    t_hw, n_hw, hw_pad = _plan_hw_tiling(C, HW, x.dtype.itemsize, vmem_bytes, B)

    x2 = x.reshape(B, C, HW)
    if hw_pad != HW:
        # Pad spatial columns with zeros so every tile is a full multiple of 128 lanes;
        # padded columns are computed (harmlessly: var=0 -> output=bias) and sliced off.
        x2 = jnp.pad(x2, ((0, 0), (0, 0), (0, hw_pad - HW)))

    # Pre-cast params to f32 once in the wrapper (no per-grid-step astype in the kernel).
    wb = jnp.stack([weight, bias], axis=0).astype(jnp.float32).reshape(2, C, 1)

    # VMEM accounting: double-buffered in/out tiles + f32 temporaries + wb tile (lane-padded).
    live_bytes = t_hw * C * (4 * x.dtype.itemsize + 12) + 2 * C * 128 * 4
    cap = max(32 << 20, (vmem_bytes * 3) // 4)   # 48 MiB on 64 MiB parts, 96 MiB on 128 MiB
    vmem_limit = int(min(max(live_bytes + (2 << 20), 32 << 20), cap))

    kernel = functools.partial(_convln_kernel, eps=eps)

    out = pl.pallas_call(
        kernel,
        out_shape=jax.ShapeDtypeStruct((B, C, hw_pad), x.dtype),
        grid_spec=pltpu.PrefetchScalarGridSpec(
            num_scalar_prefetch=0,
            grid=(B, n_hw),                                   # HW-tile axis innermost
            in_specs=[
                pl.BlockSpec((1, C, t_hw), lambda b, h: (b, 0, h)),
                pl.BlockSpec((2, C, 1), lambda b, h: (0, 0, 0)),  # constant -> DMA'd once
            ],
            out_specs=pl.BlockSpec((1, C, t_hw), lambda b, h: (b, 0, h)),
        ),
        compiler_params=pltpu.CompilerParams(
            dimension_semantics=_dimension_semantics(),
            vmem_limit_bytes=vmem_limit,
        ),
    )(x2, wb)

    if hw_pad != HW:
        out = out[:, :, :HW]
    return out.reshape(B, C, H, W)


if __name__ == "__main__":
    key = jax.random.PRNGKey(0)
    B, C, H, W = 2, 4, 16, 16

    kx, kw, kb = jax.random.split(key, 3)
    x = jax.random.normal(kx, (B, C, H, W), dtype=jnp.float32)
    # Deterministic "trained-ish" params (module init is ones/zeros; perturb so the affine matters).
    weight = jnp.ones((C,), jnp.float32) + 0.1 * jax.random.normal(kw, (C,), dtype=jnp.float32)
    bias = 0.1 * jax.random.normal(kb, (C,), dtype=jnp.float32)

    def ref_fn(xr, wr, br, eps=1e-6):
        u = jnp.mean(xr, axis=1, keepdims=True)
        s = jnp.mean((xr - u) ** 2, axis=1, keepdims=True)
        y = (xr - u) / jnp.sqrt(s + eps)
        return wr[None, :, None, None] * y + br[None, :, None, None]

    out = jax.block_until_ready(conv_layer_norm(x, weight, bias, eps=1e-6))
    assert jnp.allclose(out, ref_fn(x, weight, bias), atol=1e-5, rtol=1e-5), "mismatch vs reference"

    # Also exercise the padded path (HW = 14*14 = 196, not a multiple of 128).
    x_odd = jax.random.normal(jax.random.PRNGKey(1), (B, C, 14, 14), dtype=jnp.float32)
    out_odd = jax.block_until_ready(conv_layer_norm(x_odd, weight, bias, eps=1e-6))
    assert jnp.allclose(out_odd, ref_fn(x_odd, weight, bias), atol=1e-5, rtol=1e-5), "mismatch (padded path)"

    print("KERNEL_OK")
</pallas_src>

<mosaic_0001>
module attributes {stable_mosaic.version = 11 : i64} {
  func.func @_convln_kernel(%arg0: i32, %arg1: i32, %arg2: memref<1x4x128xf32, #tpu.memory_space<vmem>>, %arg3: memref<2x4x1xf32, #tpu.memory_space<vmem>>, %arg4: memref<1x4x128xf32, #tpu.memory_space<vmem>>) attributes {dimension_semantics = [#tpu.dimension_semantics<parallel>, #tpu.dimension_semantics<parallel>], iteration_bounds = array<i64: 2, 2>, scalar_prefetch = 0 : i64, scratch_operands = 0 : i64, tpu.core_type = #tpu.core_type<tc>, window_params = [{transform_indices = @transform_0, window_bounds = array<i64: 1, 4, 128>}, {pipeline_mode = #tpu.pipeline_mode<synchronous>, transform_indices = @transform_1, window_bounds = array<i64: 2, 4, 1>}, {transform_indices = @transform_2, window_bounds = array<i64: 1, 4, 128>}]} {
    %c0 = arith.constant 0 : index
    %c0_0 = arith.constant 0 : index
    %c0_1 = arith.constant 0 : index
    %0 = vector.load %arg2[%c0, %c0_0, %c0_1] : memref<1x4x128xf32, #tpu.memory_space<vmem>>, vector<1x4x128xf32>
    %cst = arith.constant dense<0.000000e+00> : vector<1x128xf32>
    %1 = vector.multi_reduction <add>, %0, %cst [1] : vector<1x4x128xf32> to vector<1x128xf32>
    %2 = vector.shape_cast %1 : vector<1x128xf32> to vector<1x1x128xf32>
    %cst_2 = arith.constant 4.000000e+00 : f32
    %3 = vector.broadcast %cst_2 : f32 to vector<1x1x128xf32>
    %4 = arith.divf %2, %3 : vector<1x1x128xf32>
    %5 = vector.broadcast %4 : vector<1x1x128xf32> to vector<1x4x128xf32>
    %6 = arith.subf %0, %5 : vector<1x4x128xf32>
    %7 = arith.mulf %6, %6 : vector<1x4x128xf32>
    %cst_3 = arith.constant dense<0.000000e+00> : vector<1x128xf32>
    %8 = vector.multi_reduction <add>, %7, %cst_3 [1] : vector<1x4x128xf32> to vector<1x128xf32>
    %9 = vector.shape_cast %8 : vector<1x128xf32> to vector<1x1x128xf32>
    %cst_4 = arith.constant 4.000000e+00 : f32
    %10 = vector.broadcast %cst_4 : f32 to vector<1x1x128xf32>
    %11 = arith.divf %9, %10 : vector<1x1x128xf32>
    %cst_5 = arith.constant 9.99999997E-7 : f32
    %12 = vector.broadcast %cst_5 : f32 to vector<1x1x128xf32>
    %13 = arith.addf %11, %12 : vector<1x1x128xf32>
    %14 = math.rsqrt %13 : vector<1x1x128xf32>
    %c0_6 = arith.constant 0 : index
    %c0_7 = arith.constant 0 : index
    %c0_8 = arith.constant 0 : index
    %15 = vector.load %arg3[%c0_6, %c0_7, %c0_8] : memref<2x4x1xf32, #tpu.memory_space<vmem>>, vector<2x4x1xf32>
    %16 = vector.extract_strided_slice %15 {offsets = [0, 0, 0], sizes = [1, 4, 1], strides = [1, 1, 1]} : vector<2x4x1xf32> to vector<1x4x1xf32>
    %17 = vector.extract_strided_slice %15 {offsets = [1, 0, 0], sizes = [1, 4, 1], strides = [1, 1, 1]} : vector<2x4x1xf32> to vector<1x4x1xf32>
    %18 = vector.broadcast %14 : vector<1x1x128xf32> to vector<1x4x128xf32>
    %19 = arith.mulf %6, %18 : vector<1x4x128xf32>
    %20 = vector.broadcast %16 : vector<1x4x1xf32> to vector<1x4x128xf32>
    %21 = arith.mulf %19, %20 : vector<1x4x128xf32>
    %22 = vector.broadcast %17 : vector<1x4x1xf32> to vector<1x4x128xf32>
    %23 = arith.addf %21, %22 : vector<1x4x128xf32>
    %c0_9 = arith.constant 0 : index
    %c0_10 = arith.constant 0 : index
    %c0_11 = arith.constant 0 : index
    %24 = vector.load %arg4[%c0_9, %c0_10, %c0_11] : memref<1x4x128xf32, #tpu.memory_space<vmem>>, vector<1x4x128xf32>
    tpu.vector_store %arg4[%c0_9, %c0_10, %c0_11], %23 {strides = array<i32>} : memref<1x4x128xf32, #tpu.memory_space<vmem>>, vector<1x4x128xf32>,
    return
  }
  func.func @transform_0(%arg0: i32, %arg1: i32) -> (i32, i32, i32) {
    %c0_i32 = arith.constant 0 : i32
    %c0_i32_0 = arith.constant 0 : i32
    return %arg0, %c0_i32, %arg1 : i32, i32, i32
  }
  func.func @transform_1(%arg0: i32, %arg1: i32) -> (i32, i32, i32) {
    %c0_i32 = arith.constant 0 : i32
    %c0_i32_0 = arith.constant 0 : i32
    %c0_i32_1 = arith.constant 0 : i32
    %c0_i32_2 = arith.constant 0 : i32
    return %c0_i32, %c0_i32_0, %c0_i32_1 : i32, i32, i32
  }
  func.func @transform_2(%arg0: i32, %arg1: i32) -> (i32, i32, i32) {
    %c0_i32 = arith.constant 0 : i32
    %c0_i32_0 = arith.constant 0 : i32
    return %arg0, %c0_i32, %arg1 : i32, i32, i32
  }
}

</mosaic_0001>

<llo_original>
// kernel: tpu_custom_call.1
$region0: #{tpu_custom_call.1}
  #allocation0 [shape = 'u32[]', space=smem, size = 0x4, offset = 0x4, fixed_abs, tag = 'smem constant byte address 0x4 - core index']
  #allocation1 [shape = 'u32[144,128]{1,0:T(1,128)}', space=vmem, size = 0x12000, scoped, tag = 'internal scratch']
  %s0 = inlined_call_operand.hbm [shape: f32[2,4,256], index: 0, kind: input, shape index: {}]
  %s1 = inlined_call_operand.vmem [shape: f32[2,4,1], index: 1, kind: input, shape index: {}]
  %s2 = inlined_call_operand.hbm [shape: f32[2,4,256], index: 2, kind: output, shape index: {}]
  %s3 = sld [smem:[#allocation0]]
  $region45: #{tpu_custom_call.1} parent=0
    _
  %s5 = ssub.s32 1, %s3
  %s6 = scalar_select 0, %s5, %s3
  $region1: #{tpu_custom_call.1} parent=0
    #allocation2 [shape = 'u8[4096]{0}', space=vmem, size = 0x1000, scoped, tag = 'input window, operand 0']
    #allocation3 [shape = 's32[2]{0}', space=sflag, size = 0x8, scoped, tag = 'scoped memory for tpu_custom_call.1']
    #allocation4 [shape = 's32[2]{0}', space=sflag, size = 0x8, scoped, tag = 'scoped memory for tpu_custom_call.1']
    #allocation5 [shape = 'u8[4096]{0}', space=vmem, size = 0x1000, scoped, tag = 'output window, operand 0']
    %7 = vsyncpa [#allocation3], 0
    %s8 = scalar_lea.sflag [#allocation3], 1
    %9 = vsyncpa %s8, 0
    %10 = vsyncpa [#allocation4], 0
    %s11 = scalar_lea.sflag [#allocation4], 1
    %12 = vsyncpa %s11, 0
    loop: start=0, step=1, limit=6
    $region2: #{tpu_custom_call.1} parent=1 // loop_pre_header
      _
    $region3: #{tpu_custom_call.1} parent=1 // loop_header
      %s14 = sphi 0, %s18
      %p15 = scmp.ge.s32.totalorder %s14, 6
      %s21 = sphi 0, %s33
      %s22 = sphi 0, %s29
      %s23 = sphi 0, %s21
      %s24 = sphi 0, %s22
      %s25 = sphi 0, %s23
      %s26 = sphi 0, %s24
      %s38 = sphi 0, %s40
      %s41 = sphi 0, %s38
      %s42 = sphi 0, %s41
      %s58 = sphi 0, %s42
      %s62 = sphi 0, %s62
      %s64 = sphi 0, %s62
      %s65 = sphi 0, %s64
      %s79 = sphi 0, %s65
      %s87 = sphi 0, %s89
      %s90 = sphi 0, %s87
      %s91 = sphi 0, %s90
      %s107 = sphi 0, %s91
    $region4: #{tpu_custom_call.1} parent=1 // loop_header_branch
      %17 = sbr.rel (%p15) target = $region8
    $region5: #{tpu_custom_call.1} parent=1 // loop_body
      %s19 = ssub.s32 %s14, 1
      %s20 = ssub.s32 %s14, 2
      %s27 = sadd.s32 1, %s22
      %p28 = scmp.ge.s32.totalorder %s27, 2
      %s29 = scalar_select %p28, 0, %s27
      %s30 = sadd.s32 1, %s21
      %s31 = scalar_select %p28, %s30, %s21
      %p32 = scmp.ge.s32.totalorder %s31, 2
      %s33 = scalar_select %p32, 0, %s31
      %s34 = ssub.s32 %s21, %s33
      %s35 = ssub.s32 %s22, %s29
      %s36 = sor.u32 %s34, %s35
      %p37 = scmp.eq.s32.totalorder %s36, 0
      %s39 = sadd.s32 %s38, 1
      %s40 = scalar_select %p37, %s38, %s39
      %p43 = pneg %p37
      %p44 = scmp.eq.s32.totalorder %s14, 3
      %p45 = por %p43, %p44
      %p46 = scmp.ne.s32.totalorder %s38, %s41
      %p47 = scmp.eq.s32.totalorder %s14, 0
      %p48 = por %p46, %p47
      %p49 = scmp.ne.s32.totalorder %s38, %s41
      %p50 = scmp.eq.s32.totalorder %s19, 3
      %p51 = por %p49, %p50
      %p52 = scmp.ne.s32.totalorder %s41, %s42
      %p53 = scmp.eq.s32.totalorder %s19, 0
      %p54 = por %p52, %p53
      %p55 = scmp.ne.s32.totalorder %s41, %s42
      %p56 = scmp.eq.s32.totalorder %s20, 3
      %p57 = por %p55, %p56
      %p59 = scmp.ne.s32.totalorder %s42, %s58
      %p60 = scmp.eq.s32.totalorder %s20, 0
      %p61 = por %p59, %p60
      %s63 = sadd.s32 %s62, 1
      %p66 = scmp.eq.s32.totalorder %s14, 3
      %p67 = scmp.ne.s32.totalorder %s62, %s64
      %p68 = scmp.eq.s32.totalorder %s14, 0
      %p69 = por %p67, %p68
      %p70 = scmp.ne.s32.totalorder %s62, %s64
      %p71 = scmp.eq.s32.totalorder %s19, 3
      %p72 = por %p70, %p71
      %p73 = scmp.ne.s32.totalorder %s64, %s65
      %p74 = scmp.eq.s32.totalorder %s19, 0
      %p75 = por %p73, %p74
      %p76 = scmp.ne.s32.totalorder %s64, %s65
      %p77 = scmp.eq.s32.totalorder %s20, 3
      %p78 = por %p76, %p77
      %p80 = scmp.ne.s32.totalorder %s65, %s79
      %p81 = scmp.eq.s32.totalorder %s20, 0
      %p82 = por %p80, %p81
      %s83 = ssub.s32 %s21, %s33
      %s84 = ssub.s32 %s22, %s29
      %s85 = sor.u32 %s83, %s84
      %p86 = scmp.eq.s32.totalorder %s85, 0
      %s88 = sadd.s32 %s87, 1
      %s89 = scalar_select %p86, %s87, %s88
      %p92 = pneg %p86
      %p93 = scmp.eq.s32.totalorder %s14, 3
      %p94 = por %p92, %p93
      %p95 = scmp.ne.s32.totalorder %s87, %s90
      %p96 = scmp.eq.s32.totalorder %s14, 0
      %p97 = por %p95, %p96
      %p98 = scmp.ne.s32.totalorder %s87, %s90
      %p99 = scmp.eq.s32.totalorder %s19, 3
      %p100 = por %p98, %p99
      %p101 = scmp.ne.s32.totalorder %s90, %s91
      %p102 = scmp.eq.s32.totalorder %s19, 0
      %p103 = por %p101, %p102
      %p104 = scmp.ne.s32.totalorder %s90, %s91
      %p105 = scmp.eq.s32.totalorder %s20, 3
      %p106 = por %p104, %p105
      %p108 = scmp.ne.s32.totalorder %s91, %s107
      %p109 = scmp.eq.s32.totalorder %s20, 0
      %p110 = por %p108, %p109
      %p111 = scmp.le.s32.totalorder 1, %s14
      %p112 = scmp.lt.s32.totalorder %s14, 5
      %p113 = pnand %p111, %p112
      %p114 = pneg %p113
      // Predicated region
      $region9: #{tpu_custom_call.1} parent=5 // pred_check
        _
      $region10: #{tpu_custom_call.1} parent=5 // pred_check_branch
        %116 = sbr.rel (%p113) target = $region12
      $region11: #{tpu_custom_call.1} parent=5 // pred_region
        %s117 = ssub.s32 %s14, 1
        // Predicated region
        $region13: #{tpu_custom_call.1} parent=11 // pred_check
          %p118 = pneg %p75
        $region14: #{tpu_custom_call.1} parent=11 // pred_check_branch
          %120 = sbr.rel (%p118) target = $region16
        $region15: #{tpu_custom_call.1} parent=11 // pred_region
          _
        $region16: #{tpu_custom_call.1} parent=11 // pred_fallthru
          _
      $region12: #{tpu_custom_call.1} parent=5 // pred_fallthru
        _
      %p121 = scmp.lt.s32.totalorder %s14, 4
      // Predicated region
      $region17: #{tpu_custom_call.1} parent=5 // pred_check
        %p122 = pneg %p121
      $region18: #{tpu_custom_call.1} parent=5 // pred_check_branch
        %124 = sbr.rel (%p122) target = $region20
      $region19: #{tpu_custom_call.1} parent=5 // pred_region
        // Predicated region
        $region21: #{tpu_custom_call.1} parent=19 // pred_check
          %p125 = pneg %p48
        $region22: #{tpu_custom_call.1} parent=19 // pred_check_branch
          %127 = sbr.rel (%p125) target = $region24
        $region23: #{tpu_custom_call.1} parent=19 // pred_region
          %s128 = sand.u32 %s38, 1
          %s129 = scalar_lea.sflag [#allocation3], %s128
          %s130 = sand.u32 %s38, 1
          %s131 = smul.addr %s130, 4
          %s132 = scalar_lea.vmem [#allocation2], %s131
          %s134 = ssub.s32 64, 64
          %135 = vsyncadd %s129, %s134
          %s136 = smul.addr %s21, 2
          %s137 = sadd.s32 %s22, %s136
          %s138 = smul.addr %s137, 64
          %s139 = scalar_lea.hbm %s0, %s138
          %s141 = sshll.u32 %s132, 4
          %s142 = int_to_ptr.vmem [resolvable:$true] %s141
          %144 = dma.hbm_to_vmem [thread:$0]  %s139, 64, %s142, %s129
        $region24: #{tpu_custom_call.1} parent=19 // pred_fallthru
          _
      $region20: #{tpu_custom_call.1} parent=5 // pred_fallthru
        _
      %p145 = scmp.le.s32.totalorder 1, %s14
      %p146 = scmp.lt.s32.totalorder %s14, 5
      %p147 = pnand %p145, %p146
      %p148 = pneg %p147
      // Predicated region
      $region25: #{tpu_custom_call.1} parent=5 // pred_check
        _
      $region26: #{tpu_custom_call.1} parent=5 // pred_check_branch
        %150 = sbr.rel (%p147) target = $region28
      $region27: #{tpu_custom_call.1} parent=5 // pred_region
        %s151 = ssub.s32 %s14, 1
        %s152 = sand.u32 %s41, 1
        %s153 = scalar_lea.sflag [#allocation3], %s152
        %s154 = sand.u32 %s41, 1
        %s155 = smul.addr %s154, 4
        %s156 = scalar_lea.vmem [#allocation2], %s155
        // Predicated region
        $region29: #{tpu_custom_call.1} parent=27 // pred_check
          %p157 = pneg %p54
        $region30: #{tpu_custom_call.1} parent=27 // pred_check_branch
          %159 = sbr.rel (%p157) target = $region32
        $region31: #{tpu_custom_call.1} parent=27 // pred_region
          %160 = dma.done %s153, 64
        $region32: #{tpu_custom_call.1} parent=27 // pred_fallthru
          _
        %s161 = sand.u32 %s41, 1
        %s162 = scalar_lea.sflag [#allocation3], %s161
        %s163 = sand.u32 %s41, 1
        %s164 = smul.addr %s163, 4
        %s165 = scalar_lea.vmem [#allocation2], %s164
        %p166 = pneg %p54
        %p167 = pneg %p51
        %p168 = pneg %p75
        %p169 = pneg %p72
        %p170 = pneg %p103
        %p171 = pneg %p100
        %s172 = sand.u32 %s90, 1
        %s173 = scalar_lea.sflag [#allocation4], %s172
        %s174 = sand.u32 %s90, 1
        %s175 = smul.addr %s174, 4
        %s176 = scalar_lea.vmem [#allocation5], %s175
        %v177 = vld [vmem:[%s156] sm:$0xf]
        %vm178 = vcmask 1043456
        %v179 = vsel %vm178, %v177, 0.0
        %v180 = vrot.slane %v179, 4
        %v181 = vadd.f32 %v179, %v180
        %v182 = vrot.slane %v181, 2
        %v183 = vadd.f32 %v181, %v182
        %v184 = vrot.slane %v183, 1
        %v185 = vadd.f32 %v183, %v184
        %v186 = vrcp.pop 4.0
        %v187 = vmul.f32 %v185, %v186
        %v188 = vsub.f32 %v177, %v187
        %v189 = vmul.f32 %v188, %v188
        %v190 = vsel %vm178, %v189, 0.0
        %v191 = vrot.slane %v190, 4
        %v192 = vadd.f32 %v190, %v191
        %v193 = vrot.slane %v192, 2
        %v194 = vadd.f32 %v192, %v193
        %v195 = vrot.slane %v194, 1
        %v196 = vadd.f32 %v194, %v195
        %v197 = vmul.f32 %v196, %v186
        %v198 = vadd.f32 %v197, 1e-06
        %v199 = vrsqrt.pop %v198
        %v200 = vld [vmem:[%s1] sm:$0xf]
        %v201 = vld [vmem:[%s1 + $0x4] sm:$0xf]
        %v202 = vmul.f32 %v188, %v199
        %204 = vset.pattern.permute.xlu0 0
        %205 = vperm.xlu0 %204, %v200
        %v206 = vpop.permute.xlu0 %205
        %v208 = vmul.f32 %v202, %v206
        %210 = vset.pattern.permute.xlu0 0
        %211 = vperm.xlu0 %210, %v201
        %v212 = vpop.permute.xlu0 %211
        %v214 = vadd.f32 %v208, %v212
        %215 = vst [vmem:[%s176] sm:$0xf] %v214
        %s216 = sand.u32 %s90, 1
        %s217 = scalar_lea.sflag [#allocation4], %s216
        %s218 = sand.u32 %s90, 1
        %s219 = smul.addr %s218, 4
        %s220 = scalar_lea.vmem [#allocation5], %s219
        // Predicated region
        $region33: #{tpu_custom_call.1} parent=27 // pred_check
          %p221 = pneg %p100
        $region34: #{tpu_custom_call.1} parent=27 // pred_check_branch
          %223 = sbr.rel (%p221) target = $region36
        $region35: #{tpu_custom_call.1} parent=27 // pred_region
          %s225 = ssub.s32 64, 64
          %226 = vsyncadd %s217, %s225
          %s227 = smul.addr %s23, 2
          %s228 = sadd.s32 %s24, %s227
          %s229 = smul.addr %s228, 64
          %s230 = scalar_lea.hbm %s2, %s229
          %s232 = sshll.u32 %s220, 4
          %s233 = int_to_ptr.vmem [resolvable:$true] %s232
          %235 = dma.vmem_to_hbm [thread:$0]  %s233, 64, %s230, %s217
        $region36: #{tpu_custom_call.1} parent=27 // pred_fallthru
          _
      $region28: #{tpu_custom_call.1} parent=5 // pred_fallthru
        _
      %p236 = scmp.le.s32.totalorder 2, %s14
      // Predicated region
      $region37: #{tpu_custom_call.1} parent=5 // pred_check
        %p237 = pneg %p236
      $region38: #{tpu_custom_call.1} parent=5 // pred_check_branch
        %239 = sbr.rel (%p237) target = $region40
      $region39: #{tpu_custom_call.1} parent=5 // pred_region
        %s240 = ssub.s32 %s14, 2
        // Predicated region
        $region41: #{tpu_custom_call.1} parent=39 // pred_check
          %p241 = pneg %p106
        $region42: #{tpu_custom_call.1} parent=39 // pred_check_branch
          %243 = sbr.rel (%p241) target = $region44
        $region43: #{tpu_custom_call.1} parent=39 // pred_region
          %s244 = sand.u32 %s91, 1
          %s245 = scalar_lea.sflag [#allocation4], %s244
          %s246 = sand.u32 %s91, 1
          %s247 = smul.addr %s246, 4
          %s248 = scalar_lea.vmem [#allocation5], %s247
          %249 = dma.done %s245, 64
        $region44: #{tpu_custom_call.1} parent=39 // pred_fallthru
          _
      $region40: #{tpu_custom_call.1} parent=5 // pred_fallthru
        _
    $region6: #{tpu_custom_call.1} parent=1 // loop_footer
      %s18 = sadd.s32 1, %s14
    $region7: #{tpu_custom_call.1} parent=1 // loop_footer_branch
      %13 = sbr.rel target = $region3
    $region8: #{tpu_custom_call.1} parent=1 // loop_exit
      _
    %250 = vsyncpa [#allocation3], 1
    %s251 = scalar_lea.sflag [#allocation3], 1
    %252 = vsyncpa %s251, 1
    %253 = vsyncpa [#allocation4], 1
    %s254 = scalar_lea.sflag [#allocation4], 1
    %255 = vsyncpa %s254, 1

</llo_original>
